<compile_context>
chip_gen: v7x
topology: tpu7x:2x2x1
jax: 0.10.0
libtpu: 0.0.40
codegen_flags: <defaults>
</compile_context>

<pallas_src>
import functools

import jax
import jax.numpy as jnp
from jax import lax
from jax.experimental import pallas as pl
from jax.experimental.pallas import tpu as pltpu

_VMEM_LIMIT = 32 * 1024 * 1024
_NEG = -1e30


# --------------------------------------------------------------------------- #
# Kernel 1: RMSNorm + fused QKV projection + rotate-half RoPE                  #
# --------------------------------------------------------------------------- #
def qkv_rope_kernel(x_ref, cosq_ref, sinq_ref, cosk_ref, sink_ref,
                    anorm_ref, wqkv_ref, q_ref, k_ref, v_ref,
                    *, n_heads, n_kv_heads, head_dim, eps):
    qd = n_heads * head_dim
    kd = n_kv_heads * head_dim
    hd2 = head_dim // 2

    x = x_ref[...]                                               # (bs, D) f32
    xn = x * lax.rsqrt(jnp.mean(x * x, axis=-1, keepdims=True) + eps)
    xn = (xn * anorm_ref[...]).astype(jnp.bfloat16)

    # One wide matmul for Q|K|V (keeps the MXU fed vs. three narrow-N matmuls).
    qkv = jnp.dot(xn, wqkv_ref[...], preferred_element_type=jnp.float32)
    q, k, v = qkv[:, :qd], qkv[:, qd:qd + kd], qkv[:, qd + kd:]

    # Rotate-half RoPE (weights already permuted to rotate-half layout; the
    # -sin for the first half is folded into the sin table; Q tables also carry
    # the 1/sqrt(head_dim) softmax scale).
    def rope(t, cos_t, sin_t, nh):
        outs = []
        for h in range(nh):
            th = t[:, h * head_dim:(h + 1) * head_dim]
            half_swap = jnp.concatenate([th[:, hd2:], th[:, :hd2]], axis=-1)
            outs.append(th * cos_t + half_swap * sin_t)
        return jnp.concatenate(outs, axis=-1)

    q_ref[...] = rope(q, cosq_ref[...], sinq_ref[...], n_heads).astype(q_ref.dtype)
    k_ref[...] = rope(k, cosk_ref[...], sink_ref[...], n_kv_heads).astype(k_ref.dtype)
    v_ref[...] = v.astype(v_ref.dtype)


# --------------------------------------------------------------------------- #
# Kernel 2: flash attention (online softmax) + wo + residual + SwiGLU FFN      #
# --------------------------------------------------------------------------- #
def attn_ffn_kernel(x_ref, q_ref, k_ref, v_ref, wo_ref, fnorm_ref,
                    w13_ref, w2_ref, out_ref, m_scr, l_scr, acc_scr,
                    *, n_heads, n_kv_heads, head_dim, hidden_dim, eps,
                    block_q, block_kv, sliding_window):
    qi = pl.program_id(1)
    ki = pl.program_id(2)
    nkv = pl.num_programs(2)
    repeats = n_heads // n_kv_heads

    @pl.when(ki == 0)
    def _init():
        m_scr[...] = jnp.full_like(m_scr, _NEG)
        l_scr[...] = jnp.zeros_like(l_scr)
        acc_scr[...] = jnp.zeros_like(acc_scr)

    # Skip KV tiles that lie entirely above the causal diagonal of this Q tile.
    @pl.when(ki * block_kv <= qi * block_q + block_q - 1)
    def _accumulate():
        q = q_ref[...]                                    # (bq,  H*hd)   bf16
        k = k_ref[...]                                    # (bkv, Hkv*hd) bf16
        v = v_ref[...]                                    # (bkv, Hkv*hd) bf16

        # Causal + sliding-window mask generated in-kernel (no (S,S) operand).
        row = qi * block_q + lax.broadcasted_iota(jnp.int32, (block_q, block_kv), 0)
        col = ki * block_kv + lax.broadcasted_iota(jnp.int32, (block_q, block_kv), 1)
        allowed = (col <= row) & (col > row - sliding_window)
        bias = jnp.where(allowed, 0.0, _NEG).astype(jnp.float32)

        for h in range(n_heads):
            g = h // repeats                              # GQA kv head
            qh = q[:, h * head_dim:(h + 1) * head_dim]
            kh = k[:, g * head_dim:(g + 1) * head_dim]
            vh = v[:, g * head_dim:(g + 1) * head_dim]
            # (scale already folded into q) -- q @ k^T without transpose op
            s = lax.dot_general(qh, kh, (((1,), (1,)), ((), ())),
                                preferred_element_type=jnp.float32) + bias
            m_prev = m_scr[:, h:h + 1]
            m_new = jnp.maximum(m_prev, jnp.max(s, axis=-1, keepdims=True))
            alpha = jnp.exp(m_prev - m_new)
            p = jnp.exp(s - m_new)
            l_scr[:, h:h + 1] = (alpha * l_scr[:, h:h + 1]
                                 + jnp.sum(p, axis=-1, keepdims=True))
            acc_scr[:, h * head_dim:(h + 1) * head_dim] = (
                alpha * acc_scr[:, h * head_dim:(h + 1) * head_dim]
                + jnp.dot(p.astype(jnp.bfloat16), vh,
                          preferred_element_type=jnp.float32))
            m_scr[:, h:h + 1] = m_new

    @pl.when(ki == nkv - 1)
    def _finalize():
        x = x_ref[...]                                    # (bq, D) f32
        dim = x.shape[-1]
        # Output projection accumulated per head (no concatenate).
        r = jnp.zeros((block_q, dim), jnp.float32)
        for h in range(n_heads):
            inv_l = pl.reciprocal(l_scr[:, h:h + 1], approx=True)
            oh = (acc_scr[:, h * head_dim:(h + 1) * head_dim] * inv_l
                  ).astype(jnp.bfloat16)
            r = r + jnp.dot(oh, wo_ref[h * head_dim:(h + 1) * head_dim, :],
                            preferred_element_type=jnp.float32)
        h1 = x + r

        # FFN: RMSNorm + fused (w1|w3) SwiGLU + w2  (elementwise in f32).
        hn = h1 * lax.rsqrt(jnp.mean(h1 * h1, axis=-1, keepdims=True) + eps)
        hn = (hn * fnorm_ref[...]).astype(jnp.bfloat16)
        gu = jnp.dot(hn, w13_ref[...], preferred_element_type=jnp.float32)
        g1, u = gu[:, :hidden_dim], gu[:, hidden_dim:]
        sw = (g1 * jax.nn.sigmoid(g1) * u).astype(jnp.bfloat16)
        ff = jnp.dot(sw, w2_ref[...], preferred_element_type=jnp.float32)
        out_ref[...] = (h1 + ff).astype(out_ref.dtype)


# --------------------------------------------------------------------------- #
# Wrapper                                                                      #
# --------------------------------------------------------------------------- #
def transformer_block(x, cos, sin, params, *, n_heads, n_kv_heads, head_dim,
                      eps, sliding_window, block_seq=256):
    B, S, D = x.shape
    qd = n_heads * head_dim
    kd = n_kv_heads * head_dim
    F = params["w1"].shape[1]
    hd2 = head_dim // 2
    scale = head_dim ** -0.5

    assert S % 8 == 0 and head_dim % 2 == 0 and n_heads % n_kv_heads == 0
    bs = min(S, block_seq)
    while S % bs:
        bs -= 8
    bq = bkv = bs

    # --- rotary tables, (S, head_dim), rotate-half layout --------------------
    cos_t = jnp.concatenate([cos, cos], axis=-1).astype(jnp.float32)
    sin_t = jnp.concatenate([-sin, sin], axis=-1).astype(jnp.float32)
    cos_q, sin_q = cos_t * scale, sin_t * scale        # fold 1/sqrt(hd) into Q
    cos_k, sin_k = cos_t, sin_t

    # --- offline weight prep: per-head column permutation (interleaved-pair ->
    #     rotate-half), bf16 cast, and QKV / w1|w3 fusion ----------------------
    def rot_half_perm(nh):
        idx = []
        for h in range(nh):
            base = h * head_dim
            idx += [base + 2 * i for i in range(hd2)]
            idx += [base + 2 * i + 1 for i in range(hd2)]
        return jnp.asarray(idx, jnp.int32)

    wq_p = params["wq"][:, rot_half_perm(n_heads)]
    wk_p = params["wk"][:, rot_half_perm(n_kv_heads)]
    wqkv = jnp.concatenate([wq_p, wk_p, params["wv"]], axis=1).astype(jnp.bfloat16)
    wo = params["wo"].astype(jnp.bfloat16)
    w13 = jnp.concatenate([params["w1"], params["w3"]], axis=1).astype(jnp.bfloat16)
    w2 = params["w2"].astype(jnp.bfloat16)
    anorm = params["attn_norm"].reshape(1, D).astype(jnp.float32)
    fnorm = params["ffn_norm"].reshape(1, D).astype(jnp.float32)

    # ------------------------------ kernel 1 ---------------------------------
    k1 = functools.partial(qkv_rope_kernel, n_heads=n_heads,
                           n_kv_heads=n_kv_heads, head_dim=head_dim, eps=eps)
    q, k, v = pl.pallas_call(
        k1,
        out_shape=(jax.ShapeDtypeStruct((B, S, qd), jnp.bfloat16),
                   jax.ShapeDtypeStruct((B, S, kd), jnp.bfloat16),
                   jax.ShapeDtypeStruct((B, S, kd), jnp.bfloat16)),
        grid_spec=pltpu.PrefetchScalarGridSpec(
            num_scalar_prefetch=0,
            grid=(B, S // bs),
            in_specs=[
                pl.BlockSpec((None, bs, D), lambda b, si: (b, si, 0)),
                pl.BlockSpec((bs, head_dim), lambda b, si: (si, 0)),
                pl.BlockSpec((bs, head_dim), lambda b, si: (si, 0)),
                pl.BlockSpec((bs, head_dim), lambda b, si: (si, 0)),
                pl.BlockSpec((bs, head_dim), lambda b, si: (si, 0)),
                pl.BlockSpec((1, D), lambda b, si: (0, 0)),
                pl.BlockSpec((D, qd + 2 * kd), lambda b, si: (0, 0)),
            ],
            out_specs=[
                pl.BlockSpec((None, bs, qd), lambda b, si: (b, si, 0)),
                pl.BlockSpec((None, bs, kd), lambda b, si: (b, si, 0)),
                pl.BlockSpec((None, bs, kd), lambda b, si: (b, si, 0)),
            ],
        ),
        compiler_params=pltpu.CompilerParams(
            dimension_semantics=("parallel", "parallel"),
            vmem_limit_bytes=_VMEM_LIMIT),
    )(x, cos_q, sin_q, cos_k, sin_k, anorm, wqkv)

    # ------------------------------ kernel 2 ---------------------------------
    k2 = functools.partial(attn_ffn_kernel, n_heads=n_heads,
                           n_kv_heads=n_kv_heads, head_dim=head_dim,
                           hidden_dim=F, eps=eps, block_q=bq, block_kv=bkv,
                           sliding_window=sliding_window)
    out = pl.pallas_call(
        k2,
        out_shape=jax.ShapeDtypeStruct((B, S, D), x.dtype),
        grid_spec=pltpu.PrefetchScalarGridSpec(
            num_scalar_prefetch=0,
            grid=(B, S // bq, S // bkv),
            in_specs=[
                pl.BlockSpec((None, bq, D), lambda b, qi, ki: (b, qi, 0)),
                pl.BlockSpec((None, bq, qd), lambda b, qi, ki: (b, qi, 0)),
                pl.BlockSpec((None, bkv, kd), lambda b, qi, ki: (b, ki, 0)),
                pl.BlockSpec((None, bkv, kd), lambda b, qi, ki: (b, ki, 0)),
                pl.BlockSpec((qd, D), lambda b, qi, ki: (0, 0)),
                pl.BlockSpec((1, D), lambda b, qi, ki: (0, 0)),
                pl.BlockSpec((D, 2 * F), lambda b, qi, ki: (0, 0)),
                pl.BlockSpec((F, D), lambda b, qi, ki: (0, 0)),
            ],
            out_specs=pl.BlockSpec((None, bq, D), lambda b, qi, ki: (b, qi, 0)),
            scratch_shapes=[
                pltpu.VMEM((bq, n_heads), jnp.float32),              # m
                pltpu.VMEM((bq, n_heads), jnp.float32),              # l
                pltpu.VMEM((bq, n_heads * head_dim), jnp.float32),   # acc
            ],
        ),
        compiler_params=pltpu.CompilerParams(
            dimension_semantics=("parallel", "parallel", "arbitrary"),
            vmem_limit_bytes=_VMEM_LIMIT),
    )(x, q, k, v, wo, fnorm, w13, w2)
    return out


# ---------------- pure-JAX reference (mirrors the PyTorch module) -------------
def ref_transformer_block(x, cos, sin, params, *, n_heads, n_kv_heads,
                          head_dim, eps, sliding_window):
    B, S, D = x.shape
    repeats = n_heads // n_kv_heads
    scale = head_dim ** -0.5

    def rmsnorm(v, w):
        return v * lax.rsqrt(jnp.mean(v * v, axis=-1, keepdims=True) + eps) * w

    xn = rmsnorm(x, params["attn_norm"])
    xq = (xn @ params["wq"]).reshape(B, S, n_heads, head_dim)
    xk = (xn @ params["wk"]).reshape(B, S, n_kv_heads, head_dim)
    xv = (xn @ params["wv"]).reshape(B, S, n_kv_heads, head_dim)

    freqs = cos + 1j * sin                                      # (S, hd/2)

    def rope(v):
        vc = v.reshape(*v.shape[:-1], head_dim // 2, 2)
        vc = vc[..., 0] + 1j * vc[..., 1]
        vo = vc * freqs[None, :, None, :]
        return jnp.stack([vo.real, vo.imag], axis=-1).reshape(v.shape)

    xq, xk = rope(xq), rope(xk)

    key = jnp.repeat(xk, repeats, axis=2)
    val = jnp.repeat(xv, repeats, axis=2)
    q = xq.transpose(0, 2, 1, 3)
    k = key.transpose(0, 2, 1, 3)
    v = val.transpose(0, 2, 1, 3)

    pos = jnp.arange(S)
    allowed = (pos[None, :] <= pos[:, None]) & (pos[None, :] > pos[:, None] - sliding_window)
    mask = jnp.where(allowed, 0.0, _NEG).astype(jnp.float32)

    scores = jnp.einsum("bhqd,bhkd->bhqk", q, k) * scale + mask[None, None]
    scores = jax.nn.softmax(scores.astype(jnp.float32), axis=-1)
    out = jnp.einsum("bhqk,bhkd->bhqd", scores, v)
    out = out.transpose(0, 2, 1, 3).reshape(B, S, -1)
    h = x + out @ params["wo"]
    hn = rmsnorm(h, params["ffn_norm"])
    g = hn @ params["w1"]
    u = hn @ params["w3"]
    return h + (g * jax.nn.sigmoid(g) * u) @ params["w2"]


if __name__ == "__main__":
    # Small ModelArgs-consistent shapes:
    #   dim=32, n_heads=4, n_kv_heads=2, head_dim=8, hidden_dim=64,
    #   sliding_window=8, norm_eps=1e-5, batch=2, seq=8 (prefill).
    B, S, D = 2, 8, 32
    n_heads, n_kv_heads, head_dim, hidden_dim = 4, 2, 8, 64
    sliding_window = 8
    eps = 1e-5

    key = jax.random.PRNGKey(0)
    ks = jax.random.split(key, 10)
    sc = 0.05

    def rt(a):  # make weight values exactly bf16-representable (fair compare)
        return a.astype(jnp.bfloat16).astype(jnp.float32)

    params = {
        "wq": rt(jax.random.normal(ks[0], (D, n_heads * head_dim), jnp.float32) * sc),
        "wk": rt(jax.random.normal(ks[1], (D, n_kv_heads * head_dim), jnp.float32) * sc),
        "wv": rt(jax.random.normal(ks[2], (D, n_kv_heads * head_dim), jnp.float32) * sc),
        "wo": rt(jax.random.normal(ks[3], (n_heads * head_dim, D), jnp.float32) * sc),
        "w1": rt(jax.random.normal(ks[4], (D, hidden_dim), jnp.float32) * sc),
        "w2": rt(jax.random.normal(ks[5], (hidden_dim, D), jnp.float32) * sc),
        "w3": rt(jax.random.normal(ks[6], (D, hidden_dim), jnp.float32) * sc),
        "attn_norm": jnp.ones((D,), jnp.float32),      # RMSNorm default init
        "ffn_norm": jnp.ones((D,), jnp.float32),
    }
    x = jax.random.normal(ks[7], (B, S, D), jnp.float32)

    # positions = arange(S)  (prefill branch: positions.shape[0] > 1)
    positions = jnp.arange(S, dtype=jnp.float32)
    theta = 10000.0
    inv_freq = 1.0 / (theta ** (jnp.arange(0, head_dim, 2, dtype=jnp.float32) / head_dim))
    angles = positions[:, None] * inv_freq[None, :]             # (S, hd/2)
    cos, sin = jnp.cos(angles), jnp.sin(angles)

    out = transformer_block(x, cos, sin, params, n_heads=n_heads,
                            n_kv_heads=n_kv_heads, head_dim=head_dim, eps=eps,
                            sliding_window=sliding_window)
    out = jax.block_until_ready(out)

    ref = ref_transformer_block(x, cos, sin, params, n_heads=n_heads,
                                n_kv_heads=n_kv_heads, head_dim=head_dim,
                                eps=eps, sliding_window=sliding_window)
    assert out.shape == (B, S, D)
    max_diff = float(jnp.max(jnp.abs(out - ref)))
    assert jnp.allclose(out, ref, atol=2e-2, rtol=2e-2), max_diff
    print("KERNEL_OK")
</pallas_src>

<mosaic_0001>
module attributes {stable_mosaic.version = 11 : i64} {
  func.func @qkv_rope_kernel(%arg0: i32, %arg1: i32, %arg2: memref<1x8x32xf32, #tpu.memory_space<vmem>>, %arg3: memref<8x8xf32, #tpu.memory_space<vmem>>, %arg4: memref<8x8xf32, #tpu.memory_space<vmem>>, %arg5: memref<8x8xf32, #tpu.memory_space<vmem>>, %arg6: memref<8x8xf32, #tpu.memory_space<vmem>>, %arg7: memref<1x32xf32, #tpu.memory_space<vmem>>, %arg8: memref<32x64xbf16, #tpu.memory_space<vmem>>, %arg9: memref<1x8x32xbf16, #tpu.memory_space<vmem>>, %arg10: memref<1x8x16xbf16, #tpu.memory_space<vmem>>, %arg11: memref<1x8x16xbf16, #tpu.memory_space<vmem>>) attributes {dimension_semantics = [#tpu.dimension_semantics<parallel>, #tpu.dimension_semantics<parallel>], iteration_bounds = array<i64: 2, 1>, scalar_prefetch = 0 : i64, scratch_operands = 0 : i64, tpu.core_type = #tpu.core_type<tc>, window_params = [{transform_indices = @transform_0, window_bounds = array<i64: 1, 8, 32>}, {transform_indices = @transform_1, window_bounds = array<i64: 8, 8>}, {transform_indices = @transform_2, window_bounds = array<i64: 8, 8>}, {transform_indices = @transform_3, window_bounds = array<i64: 8, 8>}, {transform_indices = @transform_4, window_bounds = array<i64: 8, 8>}, {pipeline_mode = #tpu.pipeline_mode<synchronous>, transform_indices = @transform_5, window_bounds = array<i64: 1, 32>}, {pipeline_mode = #tpu.pipeline_mode<synchronous>, transform_indices = @transform_6, window_bounds = array<i64: 32, 64>}, {transform_indices = @transform_7, window_bounds = array<i64: 1, 8, 32>}, {transform_indices = @transform_8, window_bounds = array<i64: 1, 8, 16>}, {transform_indices = @transform_9, window_bounds = array<i64: 1, 8, 16>}]} {
    %c0 = arith.constant 0 : index
    %c0_0 = arith.constant 0 : index
    %c0_1 = arith.constant 0 : index
    %0 = vector.load %arg2[%c0, %c0_0, %c0_1] : memref<1x8x32xf32, #tpu.memory_space<vmem>>, vector<1x8x32xf32>
    %1 = vector.shape_cast %0 : vector<1x8x32xf32> to vector<8x32xf32>
    %2 = arith.mulf %1, %1 : vector<8x32xf32>
    %cst = arith.constant dense<0.000000e+00> : vector<8xf32>
    %3 = vector.multi_reduction <add>, %2, %cst [1] : vector<8x32xf32> to vector<8xf32>
    %4 = vector.shape_cast %3 : vector<8xf32> to vector<8x1xf32>
    %cst_2 = arith.constant 3.200000e+01 : f32
    %5 = vector.broadcast %cst_2 : f32 to vector<8x1xf32>
    %6 = arith.divf %4, %5 : vector<8x1xf32>
    %cst_3 = arith.constant 9.99999974E-6 : f32
    %7 = vector.broadcast %cst_3 : f32 to vector<8x1xf32>
    %8 = arith.addf %6, %7 : vector<8x1xf32>
    %9 = math.rsqrt %8 : vector<8x1xf32>
    %10 = vector.broadcast %9 : vector<8x1xf32> to vector<8x32xf32>
    %11 = arith.mulf %1, %10 : vector<8x32xf32>
    %c0_4 = arith.constant 0 : index
    %c0_5 = arith.constant 0 : index
    %12 = vector.load %arg7[%c0_4, %c0_5] : memref<1x32xf32, #tpu.memory_space<vmem>>, vector<1x32xf32>
    %13 = vector.broadcast %12 : vector<1x32xf32> to vector<8x32xf32>
    %14 = arith.mulf %11, %13 : vector<8x32xf32>
    %15 = arith.truncf %14 : vector<8x32xf32> to vector<8x32xbf16>
    %c0_6 = arith.constant 0 : index
    %c0_7 = arith.constant 0 : index
    %16 = vector.load %arg8[%c0_6, %c0_7] : memref<32x64xbf16, #tpu.memory_space<vmem>>, vector<32x64xbf16>
    %cst_8 = arith.constant dense<0.000000e+00> : vector<8x64xf32>
    %17 = tpu.matmul %15, %16, %cst_8 {dimension_numbers = #tpu.dot_dimension_numbers<[1], [0], [0], [1], [0, 0, 1, 1], [], []>} : vector<8x32xbf16>, vector<32x64xbf16>, vector<8x64xf32> -> vector<8x64xf32>
    %18 = vector.extract_strided_slice %17 {offsets = [0, 0], sizes = [8, 32], strides = [1, 1]} : vector<8x64xf32> to vector<8x32xf32>
    %19 = vector.extract_strided_slice %17 {offsets = [0, 32], sizes = [8, 16], strides = [1, 1]} : vector<8x64xf32> to vector<8x16xf32>
    %20 = vector.extract_strided_slice %17 {offsets = [0, 48], sizes = [8, 16], strides = [1, 1]} : vector<8x64xf32> to vector<8x16xf32>
    %c0_9 = arith.constant 0 : index
    %c0_10 = arith.constant 0 : index
    %21 = vector.load %arg3[%c0_9, %c0_10] : memref<8x8xf32, #tpu.memory_space<vmem>>, vector<8x8xf32>
    %c0_11 = arith.constant 0 : index
    %c0_12 = arith.constant 0 : index
    %22 = vector.load %arg4[%c0_11, %c0_12] : memref<8x8xf32, #tpu.memory_space<vmem>>, vector<8x8xf32>
    %23 = vector.extract_strided_slice %18 {offsets = [0, 0], sizes = [8, 8], strides = [1, 1]} : vector<8x32xf32> to vector<8x8xf32>
    %24 = vector.extract_strided_slice %23 {offsets = [0, 4], sizes = [8, 4], strides = [1, 1]} : vector<8x8xf32> to vector<8x4xf32>
    %25 = vector.extract_strided_slice %23 {offsets = [0, 0], sizes = [8, 4], strides = [1, 1]} : vector<8x8xf32> to vector<8x4xf32>
    %26 = tpu.concatenate %24, %25 in 1 : vector<8x4xf32>, vector<8x4xf32> -> vector<8x8xf32>
    %27 = arith.mulf %23, %21 : vector<8x8xf32>
    %28 = arith.mulf %26, %22 : vector<8x8xf32>
    %29 = arith.addf %27, %28 : vector<8x8xf32>
    %30 = vector.extract_strided_slice %18 {offsets = [0, 8], sizes = [8, 8], strides = [1, 1]} : vector<8x32xf32> to vector<8x8xf32>
    %31 = vector.extract_strided_slice %30 {offsets = [0, 4], sizes = [8, 4], strides = [1, 1]} : vector<8x8xf32> to vector<8x4xf32>
    %32 = vector.extract_strided_slice %30 {offsets = [0, 0], sizes = [8, 4], strides = [1, 1]} : vector<8x8xf32> to vector<8x4xf32>
    %33 = tpu.concatenate %31, %32 in 1 : vector<8x4xf32>, vector<8x4xf32> -> vector<8x8xf32>
    %34 = arith.mulf %30, %21 : vector<8x8xf32>
    %35 = arith.mulf %33, %22 : vector<8x8xf32>
    %36 = arith.addf %34, %35 : vector<8x8xf32>
    %37 = vector.extract_strided_slice %18 {offsets = [0, 16], sizes = [8, 8], strides = [1, 1]} : vector<8x32xf32> to vector<8x8xf32>
    %38 = vector.extract_strided_slice %37 {offsets = [0, 4], sizes = [8, 4], strides = [1, 1]} : vector<8x8xf32> to vector<8x4xf32>
    %39 = vector.extract_strided_slice %37 {offsets = [0, 0], sizes = [8, 4], strides = [1, 1]} : vector<8x8xf32> to vector<8x4xf32>
    %40 = tpu.concatenate %38, %39 in 1 : vector<8x4xf32>, vector<8x4xf32> -> vector<8x8xf32>
    %41 = arith.mulf %37, %21 : vector<8x8xf32>
    %42 = arith.mulf %40, %22 : vector<8x8xf32>
    %43 = arith.addf %41, %42 : vector<8x8xf32>
    %44 = vector.extract_strided_slice %18 {offsets = [0, 24], sizes = [8, 8], strides = [1, 1]} : vector<8x32xf32> to vector<8x8xf32>
    %45 = vector.extract_strided_slice %44 {offsets = [0, 4], sizes = [8, 4], strides = [1, 1]} : vector<8x8xf32> to vector<8x4xf32>
    %46 = vector.extract_strided_slice %44 {offsets = [0, 0], sizes = [8, 4], strides = [1, 1]} : vector<8x8xf32> to vector<8x4xf32>
    %47 = tpu.concatenate %45, %46 in 1 : vector<8x4xf32>, vector<8x4xf32> -> vector<8x8xf32>
    %48 = arith.mulf %44, %21 : vector<8x8xf32>
    %49 = arith.mulf %47, %22 : vector<8x8xf32>
    %50 = arith.addf %48, %49 : vector<8x8xf32>
    %51 = tpu.concatenate %29, %36, %43, %50 in 1 : vector<8x8xf32>, vector<8x8xf32>, vector<8x8xf32>, vector<8x8xf32> -> vector<8x32xf32>
    %52 = arith.truncf %51 : vector<8x32xf32> to vector<8x32xbf16>
    %c0_13 = arith.constant 0 : index
    %c0_14 = arith.constant 0 : index
    %c0_15 = arith.constant 0 : index
    %53 = vector.load %arg9[%c0_13, %c0_14, %c0_15] : memref<1x8x32xbf16, #tpu.memory_space<vmem>>, vector<1x8x32xbf16>
    %54 = vector.shape_cast %53 : vector<1x8x32xbf16> to vector<8x32xbf16>
    %55 = vector.shape_cast %52 : vector<8x32xbf16> to vector<1x8x32xbf16>
    tpu.vector_store %arg9[%c0_13, %c0_14, %c0_15], %55 {strides = array<i32>} : memref<1x8x32xbf16, #tpu.memory_space<vmem>>, vector<1x8x32xbf16>,
    %c0_16 = arith.constant 0 : index
    %c0_17 = arith.constant 0 : index
    %56 = vector.load %arg5[%c0_16, %c0_17] : memref<8x8xf32, #tpu.memory_space<vmem>>, vector<8x8xf32>
    %c0_18 = arith.constant 0 : index
    %c0_19 = arith.constant 0 : index
    %57 = vector.load %arg6[%c0_18, %c0_19] : memref<8x8xf32, #tpu.memory_space<vmem>>, vector<8x8xf32>
    %58 = vector.extract_strided_slice %19 {offsets = [0, 0], sizes = [8, 8], strides = [1, 1]} : vector<8x16xf32> to vector<8x8xf32>
    %59 = vector.extract_strided_slice %58 {offsets = [0, 4], sizes = [8, 4], strides = [1, 1]} : vector<8x8xf32> to vector<8x4xf32>
    %60 = vector.extract_strided_slice %58 {offsets = [0, 0], sizes = [8, 4], strides = [1, 1]} : vector<8x8xf32> to vector<8x4xf32>
    %61 = tpu.concatenate %59, %60 in 1 : vector<8x4xf32>, vector<8x4xf32> -> vector<8x8xf32>
    %62 = arith.mulf %58, %56 : vector<8x8xf32>
    %63 = arith.mulf %61, %57 : vector<8x8xf32>
    %64 = arith.addf %62, %63 : vector<8x8xf32>
    %65 = vector.extract_strided_slice %19 {offsets = [0, 8], sizes = [8, 8], strides = [1, 1]} : vector<8x16xf32> to vector<8x8xf32>
    %66 = vector.extract_strided_slice %65 {offsets = [0, 4], sizes = [8, 4], strides = [1, 1]} : vector<8x8xf32> to vector<8x4xf32>
    %67 = vector.extract_strided_slice %65 {offsets = [0, 0], sizes = [8, 4], strides = [1, 1]} : vector<8x8xf32> to vector<8x4xf32>
    %68 = tpu.concatenate %66, %67 in 1 : vector<8x4xf32>, vector<8x4xf32> -> vector<8x8xf32>
    %69 = arith.mulf %65, %56 : vector<8x8xf32>
    %70 = arith.mulf %68, %57 : vector<8x8xf32>
    %71 = arith.addf %69, %70 : vector<8x8xf32>
    %72 = tpu.concatenate %64, %71 in 1 : vector<8x8xf32>, vector<8x8xf32> -> vector<8x16xf32>
    %73 = arith.truncf %72 : vector<8x16xf32> to vector<8x16xbf16>
    %c0_20 = arith.constant 0 : index
    %c0_21 = arith.constant 0 : index
    %c0_22 = arith.constant 0 : index
    %74 = vector.load %arg10[%c0_20, %c0_21, %c0_22] : memref<1x8x16xbf16, #tpu.memory_space<vmem>>, vector<1x8x16xbf16>
    %75 = vector.shape_cast %74 : vector<1x8x16xbf16> to vector<8x16xbf16>
    %76 = vector.shape_cast %73 : vector<8x16xbf16> to vector<1x8x16xbf16>
    tpu.vector_store %arg10[%c0_20, %c0_21, %c0_22], %76 {strides = array<i32>} : memref<1x8x16xbf16, #tpu.memory_space<vmem>>, vector<1x8x16xbf16>,
    %77 = arith.truncf %20 : vector<8x16xf32> to vector<8x16xbf16>
    %c0_23 = arith.constant 0 : index
    %c0_24 = arith.constant 0 : index
    %c0_25 = arith.constant 0 : index
    %78 = vector.load %arg11[%c0_23, %c0_24, %c0_25] : memref<1x8x16xbf16, #tpu.memory_space<vmem>>, vector<1x8x16xbf16>
    %79 = vector.shape_cast %78 : vector<1x8x16xbf16> to vector<8x16xbf16>
    %80 = vector.shape_cast %77 : vector<8x16xbf16> to vector<1x8x16xbf16>
    tpu.vector_store %arg11[%c0_23, %c0_24, %c0_25], %80 {strides = array<i32>} : memref<1x8x16xbf16, #tpu.memory_space<vmem>>, vector<1x8x16xbf16>,
    return
  }
  func.func @transform_0(%arg0: i32, %arg1: i32) -> (i32, i32, i32) {
    %c0_i32 = arith.constant 0 : i32
    %c0_i32_0 = arith.constant 0 : i32
    return %arg0, %arg1, %c0_i32 : i32, i32, i32
  }
  func.func @transform_1(%arg0: i32, %arg1: i32) -> (i32, i32) {
    %c0_i32 = arith.constant 0 : i32
    %c0_i32_0 = arith.constant 0 : i32
    return %arg1, %c0_i32 : i32, i32
  }
  func.func @transform_2(%arg0: i32, %arg1: i32) -> (i32, i32) {
    %c0_i32 = arith.constant 0 : i32
    %c0_i32_0 = arith.constant 0 : i32
    return %arg1, %c0_i32 : i32, i32
  }
  func.func @transform_3(%arg0: i32, %arg1: i32) -> (i32, i32) {
    %c0_i32 = arith.constant 0 : i32
    %c0_i32_0 = arith.constant 0 : i32
    return %arg1, %c0_i32 : i32, i32
  }
  func.func @transform_4(%arg0: i32, %arg1: i32) -> (i32, i32) {
    %c0_i32 = arith.constant 0 : i32
    %c0_i32_0 = arith.constant 0 : i32
    return %arg1, %c0_i32 : i32, i32
  }
  func.func @transform_5(%arg0: i32, %arg1: i32) -> (i32, i32) {
    %c0_i32 = arith.constant 0 : i32
    %c0_i32_0 = arith.constant 0 : i32
    %c0_i32_1 = arith.constant 0 : i32
    return %c0_i32, %c0_i32_0 : i32, i32
  }
  func.func @transform_6(%arg0: i32, %arg1: i32) -> (i32, i32) {
    %c0_i32 = arith.constant 0 : i32
    %c0_i32_0 = arith.constant 0 : i32
    %c0_i32_1 = arith.constant 0 : i32
    return %c0_i32, %c0_i32_0 : i32, i32
  }
  func.func @transform_7(%arg0: i32, %arg1: i32) -> (i32, i32, i32) {
    %c0_i32 = arith.constant 0 : i32
    %c0_i32_0 = arith.constant 0 : i32
    return %arg0, %arg1, %c0_i32 : i32, i32, i32
  }
  func.func @transform_8(%arg0: i32, %arg1: i32) -> (i32, i32, i32) {
    %c0_i32 = arith.constant 0 : i32
    %c0_i32_0 = arith.constant 0 : i32
    return %arg0, %arg1, %c0_i32 : i32, i32, i32
  }
  func.func @transform_9(%arg0: i32, %arg1: i32) -> (i32, i32, i32) {
    %c0_i32 = arith.constant 0 : i32
    %c0_i32_0 = arith.constant 0 : i32
    return %arg0, %arg1, %c0_i32 : i32, i32, i32
  }
}

</mosaic_0001>

<llo_original>
// kernel: tpu_custom_call.1
$region0: #{tpu_custom_call.1}
  #allocation0 [shape = 'u32[]', space=smem, size = 0x4, offset = 0x4, fixed_abs, tag = 'smem constant byte address 0x4 - core index']
  #allocation1 [shape = 'u32[144,128]{1,0:T(1,128)}', space=vmem, size = 0x12000, scoped, tag = 'internal scratch']
  %s0 = inlined_call_operand.hbm [shape: f32[2,8,32], index: 0, kind: input, shape index: {}]
  %s1 = inlined_call_operand.hbm [shape: f32[8,8], index: 1, kind: input, shape index: {}]
  %s2 = inlined_call_operand.hbm [shape: f32[8,8], index: 2, kind: input, shape index: {}]
  %s3 = inlined_call_operand.hbm [shape: f32[8,8], index: 3, kind: input, shape index: {}]
  %s4 = inlined_call_operand.hbm [shape: f32[8,8], index: 4, kind: input, shape index: {}]
  %s5 = inlined_call_operand.vmem [shape: f32[1,32], index: 5, kind: input, shape index: {}]
  %s6 = inlined_call_operand.vmem [shape: bf16[32,64], index: 6, kind: input, shape index: {}]
  %s7 = inlined_call_operand.hbm [shape: bf16[2,8,32], index: 7, kind: output, shape index: {0}]
  %s8 = inlined_call_operand.hbm [shape: bf16[2,8,16], index: 8, kind: output, shape index: {1}]
  %s9 = inlined_call_operand.hbm [shape: bf16[2,8,16], index: 9, kind: output, shape index: {2}]
  %10 = xla_tuple %s7, %s8, %s9
  %s11 = sld [smem:[#allocation0]]
  $region97: #{tpu_custom_call.1} parent=0
    _
  %s13 = ssub.s32 1, %s11
  %s14 = scalar_select 0, %s13, %s11
  $region1: #{tpu_custom_call.1} parent=0
    #allocation2 [shape = 'u8[8192]{0}', space=vmem, size = 0x2000, scoped, tag = 'input window, operand 0']
    #allocation3 [shape = 's32[2]{0}', space=sflag, size = 0x8, scoped, tag = 'scoped memory for tpu_custom_call.1']
    #allocation4 [shape = 's32[2]{0}', space=sflag, size = 0x8, scoped, tag = 'scoped memory for tpu_custom_call.1']
    #allocation5 [shape = 'u8[4096]{0}', space=vmem, size = 0x1000, scoped, tag = 'input window, operand 1, single buffered']
    #allocation6 [shape = 's32[1]{0}', space=sflag, size = 0x4, scoped, tag = 'scoped memory for tpu_custom_call.1']
    #allocation7 [shape = 'u8[4096]{0}', space=vmem, size = 0x1000, scoped, tag = 'input window, operand 2, single buffered']
    #allocation8 [shape = 'u8[4096]{0}', space=vmem, size = 0x1000, scoped, tag = 'input window, operand 3, single buffered']
    #allocation9 [shape = 's32[1]{0}', space=sflag, size = 0x4, scoped, tag = 'scoped memory for tpu_custom_call.1']
    #allocation10 [shape = 'u8[4096]{0}', space=vmem, size = 0x1000, scoped, tag = 'input window, operand 4, single buffered']
    #allocation11 [shape = 'u8[4096]{0}', space=vmem, size = 0x1000, scoped, tag = 'output window, operand 0']
    #allocation12 [shape = 'u8[4096]{0}', space=vmem, size = 0x1000, scoped, tag = 'output window, operand 1']
    #allocation13 [shape = 's32[2]{0}', space=sflag, size = 0x8, scoped, tag = 'scoped memory for tpu_custom_call.1']
    #allocation14 [shape = 'u8[4096]{0}', space=vmem, size = 0x1000, scoped, tag = 'output window, operand 2']
    %15 = vsyncpa [#allocation3], 0
    %s16 = scalar_lea.sflag [#allocation3], 1
    %17 = vsyncpa %s16, 0
    %18 = vsyncpa [#allocation6], 0
    %19 = vsyncpa [#allocation9], 0
    %20 = vsyncpa [#allocation4], 0
    %s21 = scalar_lea.sflag [#allocation4], 1
    %22 = vsyncpa %s21, 0
    %23 = vsyncpa [#allocation13], 0
    %s24 = scalar_lea.sflag [#allocation13], 1
    %25 = vsyncpa %s24, 0
    loop: start=0, step=1, limit=4
    $region2: #{tpu_custom_call.1} parent=1 // loop_pre_header
      _
    $region3: #{tpu_custom_call.1} parent=1 // loop_header
      %s27 = sphi 0, %s31
      %p28 = scmp.ge.s32.totalorder %s27, 4
      %s34 = sphi 0, %s46
      %s35 = sphi 0, %s42
      %s36 = sphi 0, %s34
      %s37 = sphi 0, %s35
      %s38 = sphi 0, %s36
      %s39 = sphi 0, %s37
      %s51 = sphi 0, %s53
      %s54 = sphi 0, %s51
      %s55 = sphi 0, %s54
      %s71 = sphi 0, %s55
      %s77 = sphi 0, %s79
      %s80 = sphi 0, %s77
      %s81 = sphi 0, %s80
      %s97 = sphi 0, %s81
      %s103 = sphi 0, %s105
      %s106 = sphi 0, %s103
      %s107 = sphi 0, %s106
      %s123 = sphi 0, %s107
      %s129 = sphi 0, %s131
      %s132 = sphi 0, %s129
      %s133 = sphi 0, %s132
      %s149 = sphi 0, %s133
      %s155 = sphi 0, %s157
      %s158 = sphi 0, %s155
      %s159 = sphi 0, %s158
      %s175 = sphi 0, %s159
      %s179 = sphi 0, %s179
      %s181 = sphi 0, %s179
      %s182 = sphi 0, %s181
      %s196 = sphi 0, %s182
      %s200 = sphi 0, %s200
      %s202 = sphi 0, %s200
      %s203 = sphi 0, %s202
      %s217 = sphi 0, %s203
      %s225 = sphi 0, %s227
      %s228 = sphi 0, %s225
      %s229 = sphi 0, %s228
      %s245 = sphi 0, %s229
      %s253 = sphi 0, %s255
      %s256 = sphi 0, %s253
      %s257 = sphi 0, %s256
      %s273 = sphi 0, %s257
      %s281 = sphi 0, %s283
      %s284 = sphi 0, %s281
      %s285 = sphi 0, %s284
      %s301 = sphi 0, %s285
    $region4: #{tpu_custom_call.1} parent=1 // loop_header_branch
      %30 = sbr.rel (%p28) target = $region8
    $region5: #{tpu_custom_call.1} parent=1 // loop_body
      %s32 = ssub.s32 %s27, 1
      %s33 = ssub.s32 %s27, 2
      %s40 = sadd.s32 1, %s35
      %p41 = scmp.ge.s32.totalorder %s40, 1
      %s42 = scalar_select %p41, 0, %s40
      %s43 = sadd.s32 1, %s34
      %s44 = scalar_select %p41, %s43, %s34
      %p45 = scmp.ge.s32.totalorder %s44, 2
      %s46 = scalar_select %p45, 0, %s44
      %s47 = ssub.s32 %s34, %s46
      %s48 = ssub.s32 %s35, %s42
      %s49 = sor.u32 %s47, %s48
      %p50 = scmp.eq.s32.totalorder %s49, 0
      %s52 = sadd.s32 %s51, 1
      %s53 = scalar_select %p50, %s51, %s52
      %p56 = pneg %p50
      %p57 = scmp.eq.s32.totalorder %s27, 1
      %p58 = por %p56, %p57
      %p59 = scmp.ne.s32.totalorder %s51, %s54
      %p60 = scmp.eq.s32.totalorder %s27, 0
      %p61 = por %p59, %p60
      %p62 = scmp.ne.s32.totalorder %s51, %s54
      %p63 = scmp.eq.s32.totalorder %s32, 1
      %p64 = por %p62, %p63
      %p65 = scmp.ne.s32.totalorder %s54, %s55
      %p66 = scmp.eq.s32.totalorder %s32, 0
      %p67 = por %p65, %p66
      %p68 = scmp.ne.s32.totalorder %s54, %s55
      %p69 = scmp.eq.s32.totalorder %s33, 1
      %p70 = por %p68, %p69
      %p72 = scmp.ne.s32.totalorder %s55, %s71
      %p73 = scmp.eq.s32.totalorder %s33, 0
      %p74 = por %p72, %p73
      %s75 = ssub.s32 %s35, %s42
      %p76 = scmp.eq.s32.totalorder %s75, 0
      %s78 = sadd.s32 %s77, 1
      %s79 = scalar_select %p76, %s77, %s78
      %p82 = pneg %p76
      %p83 = scmp.eq.s32.totalorder %s27, 1
      %p84 = por %p82, %p83
      %p85 = scmp.ne.s32.totalorder %s77, %s80
      %p86 = scmp.eq.s32.totalorder %s27, 0
      %p87 = por %p85, %p86
      %p88 = scmp.ne.s32.totalorder %s77, %s80
      %p89 = scmp.eq.s32.totalorder %s32, 1
      %p90 = por %p88, %p89
      %p91 = scmp.ne.s32.totalorder %s80, %s81
      %p92 = scmp.eq.s32.totalorder %s32, 0
      %p93 = por %p91, %p92
      %p94 = scmp.ne.s32.totalorder %s80, %s81
      %p95 = scmp.eq.s32.totalorder %s33, 1
      %p96 = por %p94, %p95
      %p98 = scmp.ne.s32.totalorder %s81, %s97
      %p99 = scmp.eq.s32.totalorder %s33, 0
      %p100 = por %p98, %p99
      %s101 = ssub.s32 %s35, %s42
      %p102 = scmp.eq.s32.totalorder %s101, 0
      %s104 = sadd.s32 %s103, 1
      %s105 = scalar_select %p102, %s103, %s104
      %p108 = pneg %p102
      %p109 = scmp.eq.s32.totalorder %s27, 1
      %p110 = por %p108, %p109
      %p111 = scmp.ne.s32.totalorder %s103, %s106
      %p112 = scmp.eq.s32.totalorder %s27, 0
      %p113 = por %p111, %p112
      %p114 = scmp.ne.s32.totalorder %s103, %s106
      %p115 = scmp.eq.s32.totalorder %s32, 1
      %p116 = por %p114, %p115
      %p117 = scmp.ne.s32.totalorder %s106, %s107
      %p118 = scmp.eq.s32.totalorder %s32, 0
      %p119 = por %p117, %p118
      %p120 = scmp.ne.s32.totalorder %s106, %s107
      %p121 = scmp.eq.s32.totalorder %s33, 1
      %p122 = por %p120, %p121
      %p124 = scmp.ne.s32.totalorder %s107, %s123
      %p125 = scmp.eq.s32.totalorder %s33, 0
      %p126 = por %p124, %p125
      %s127 = ssub.s32 %s35, %s42
      %p128 = scmp.eq.s32.totalorder %s127, 0
      %s130 = sadd.s32 %s129, 1
      %s131 = scalar_select %p128, %s129, %s130
      %p134 = pneg %p128
      %p135 = scmp.eq.s32.totalorder %s27, 1
      %p136 = por %p134, %p135
      %p137 = scmp.ne.s32.totalorder %s129, %s132
      %p138 = scmp.eq.s32.totalorder %s27, 0
      %p139 = por %p137, %p138
      %p140 = scmp.ne.s32.totalorder %s129, %s132
      %p141 = scmp.eq.s32.totalorder %s32, 1
      %p142 = por %p140, %p141
      %p143 = scmp.ne.s32.totalorder %s132, %s133
      %p144 = scmp.eq.s32.totalorder %s32, 0
      %p145 = por %p143, %p144
      %p146 = scmp.ne.s32.totalorder %s132, %s133
      %p147 = scmp.eq.s32.totalorder %s33, 1
      %p148 = por %p146, %p147
      %p150 = scmp.ne.s32.totalorder %s133, %s149
      %p151 = scmp.eq.s32.totalorder %s33, 0
      %p152 = por %p150, %p151
      %s153 = ssub.s32 %s35, %s42
      %p154 = scmp.eq.s32.totalorder %s153, 0
      %s156 = sadd.s32 %s155, 1
      %s157 = scalar_select %p154, %s155, %s156
      %p160 = pneg %p154
      %p161 = scmp.eq.s32.totalorder %s27, 1
      %p162 = por %p160, %p161
      %p163 = scmp.ne.s32.totalorder %s155, %s158
      %p164 = scmp.eq.s32.totalorder %s27, 0
      %p165 = por %p163, %p164
      %p166 = scmp.ne.s32.totalorder %s155, %s158
      %p167 = scmp.eq.s32.totalorder %s32, 1
      %p168 = por %p166, %p167
      %p169 = scmp.ne.s32.totalorder %s158, %s159
      %p170 = scmp.eq.s32.totalorder %s32, 0
      %p171 = por %p169, %p170
      %p172 = scmp.ne.s32.totalorder %s158, %s159
      %p173 = scmp.eq.s32.totalorder %s33, 1
      %p174 = por %p172, %p173
      %p176 = scmp.ne.s32.totalorder %s159, %s175
      %p177 = scmp.eq.s32.totalorder %s33, 0
      %p178 = por %p176, %p177
      %s180 = sadd.s32 %s179, 1
      %p183 = scmp.eq.s32.totalorder %s27, 1
      %p184 = scmp.ne.s32.totalorder %s179, %s181
      %p185 = scmp.eq.s32.totalorder %s27, 0
      %p186 = por %p184, %p185
      %p187 = scmp.ne.s32.totalorder %s179, %s181
      %p188 = scmp.eq.s32.totalorder %s32, 1
      %p189 = por %p187, %p188
      %p190 = scmp.ne.s32.totalorder %s181, %s182
      %p191 = scmp.eq.s32.totalorder %s32, 0
      %p192 = por %p190, %p191
      %p193 = scmp.ne.s32.totalorder %s181, %s182
      %p194 = scmp.eq.s32.totalorder %s33, 1
      %p195 = por %p193, %p194
      %p197 = scmp.ne.s32.totalorder %s182, %s196
      %p198 = scmp.eq.s32.totalorder %s33, 0
      %p199 = por %p197, %p198
      %s201 = sadd.s32 %s200, 1
      %p204 = scmp.eq.s32.totalorder %s27, 1
      %p205 = scmp.ne.s32.totalorder %s200, %s202
      %p206 = scmp.eq.s32.totalorder %s27, 0
      %p207 = por %p205, %p206
      %p208 = scmp.ne.s32.totalorder %s200, %s202
      %p209 = scmp.eq.s32.totalorder %s32, 1
      %p210 = por %p208, %p209
      %p211 = scmp.ne.s32.totalorder %s202, %s203
      %p212 = scmp.eq.s32.totalorder %s32, 0
      %p213 = por %p211, %p212
      %p214 = scmp.ne.s32.totalorder %s202, %s203
      %p215 = scmp.eq.s32.totalorder %s33, 1
      %p216 = por %p214, %p215
      %p218 = scmp.ne.s32.totalorder %s203, %s217
      %p219 = scmp.eq.s32.totalorder %s33, 0
      %p220 = por %p218, %p219
      %s221 = ssub.s32 %s34, %s46
      %s222 = ssub.s32 %s35, %s42
      %s223 = sor.u32 %s221, %s222
      %p224 = scmp.eq.s32.totalorder %s223, 0
      %s226 = sadd.s32 %s225, 1
      %s227 = scalar_select %p224, %s225, %s226
      %p230 = pneg %p224
      %p231 = scmp.eq.s32.totalorder %s27, 1
      %p232 = por %p230, %p231
      %p233 = scmp.ne.s32.totalorder %s225, %s228
      %p234 = scmp.eq.s32.totalorder %s27, 0
      %p235 = por %p233, %p234
      %p236 = scmp.ne.s32.totalorder %s225, %s228
      %p237 = scmp.eq.s32.totalorder %s32, 1
      %p238 = por %p236, %p237
      %p239 = scmp.ne.s32.totalorder %s228, %s229
      %p240 = scmp.eq.s32.totalorder %s32, 0
      %p241 = por %p239, %p240
      %p242 = scmp.ne.s32.totalorder %s228, %s229
      %p243 = scmp.eq.s32.totalorder %s33, 1
      %p244 = por %p242, %p243
      %p246 = scmp.ne.s32.totalorder %s229, %s245
      %p247 = scmp.eq.s32.totalorder %s33, 0
      %p248 = por %p246, %p247
      %s249 = ssub.s32 %s34, %s46
      %s250 = ssub.s32 %s35, %s42
      %s251 = sor.u32 %s249, %s250
      %p252 = scmp.eq.s32.totalorder %s251, 0
      %s254 = sadd.s32 %s253, 1
      %s255 = scalar_select %p252, %s253, %s254
      %p258 = pneg %p252
      %p259 = scmp.eq.s32.totalorder %s27, 1
      %p260 = por %p258, %p259
      %p261 = scmp.ne.s32.totalorder %s253, %s256
      %p262 = scmp.eq.s32.totalorder %s27, 0
      %p263 = por %p261, %p262
      %p264 = scmp.ne.s32.totalorder %s253, %s256
      %p265 = scmp.eq.s32.totalorder %s32, 1
      %p266 = por %p264, %p265
      %p267 = scmp.ne.s32.totalorder %s256, %s257
      %p268 = scmp.eq.s32.totalorder %s32, 0
      %p269 = por %p267, %p268
      %p270 = scmp.ne.s32.totalorder %s256, %s257
      %p271 = scmp.eq.s32.totalorder %s33, 1
      %p272 = por %p270, %p271
      %p274 = scmp.ne.s32.totalorder %s257, %s273
      %p275 = scmp.eq.s32.totalorder %s33, 0
      %p276 = por %p274, %p275
      %s277 = ssub.s32 %s34, %s46
      %s278 = ssub.s32 %s35, %s42
      %s279 = sor.u32 %s277, %s278
      %p280 = scmp.eq.s32.totalorder %s279, 0
      %s282 = sadd.s32 %s281, 1
      %s283 = scalar_select %p280, %s281, %s282
      %p286 = pneg %p280
      %p287 = scmp.eq.s32.totalorder %s27, 1
      %p288 = por %p286, %p287
      %p289 = scmp.ne.s32.totalorder %s281, %s284
      %p290 = scmp.eq.s32.totalorder %s27, 0
      %p291 = por %p289, %p290
      %p292 = scmp.ne.s32.totalorder %s281, %s284
      %p293 = scmp.eq.s32.totalorder %s32, 1
      %p294 = por %p292, %p293
      %p295 = scmp.ne.s32.totalorder %s284, %s285
      %p296 = scmp.eq.s32.totalorder %s32, 0
      %p297 = por %p295, %p296
      %p298 = scmp.ne.s32.totalorder %s284, %s285
      %p299 = scmp.eq.s32.totalorder %s33, 1
      %p300 = por %p298, %p299
      %p302 = scmp.ne.s32.totalorder %s285, %s301
      %p303 = scmp.eq.s32.totalorder %s33, 0
      %p304 = por %p302, %p303
      %p305 = scmp.le.s32.totalorder 1, %s27
      %p306 = scmp.lt.s32.totalorder %s27, 3
      %p307 = pnand %p305, %p306
      %p308 = pneg %p307
      // Predicated region
      $region9: #{tpu_custom_call.1} parent=5 // pred_check
        _
      $region10: #{tpu_custom_call.1} parent=5 // pred_check_branch
        %310 = sbr.rel (%p307) target = $region12
      $region11: #{tpu_custom_call.1} parent=5 // pred_region
        %s311 = ssub.s32 %s27, 1
        // Predicated region
        $region13: #{tpu_custom_call.1} parent=11 // pred_check
          %p312 = pneg %p93
        $region14: #{tpu_custom_call.1} parent=11 // pred_check_branch
          %314 = sbr.rel (%p312) target = $region16
        $region15: #{tpu_custom_call.1} parent=11 // pred_region
          %s316 = ssub.s32 128, 128
          %317 = vsyncadd [#allocation6], %s316
          %s318 = smul.addr %s37, 128
          %s319 = scalar_lea.hbm %s1, %s318
          %s321 = sshll.u32 [#allocation5], 4
          %s322 = int_to_ptr.vmem [resolvable:$true] %s321
          %324 = dma.hbm_to_vmem [thread:$0]  %s319, 128, %s322, [#allocation6]
        $region16: #{tpu_custom_call.1} parent=11 // pred_fallthru
          _
        // Predicated region
        $region17: #{tpu_custom_call.1} parent=11 // pred_check
          %p325 = pneg %p119
        $region18: #{tpu_custom_call.1} parent=11 // pred_check_branch
          %327 = sbr.rel (%p325) target = $region20
        $region19: #{tpu_custom_call.1} parent=11 // pred_region
          %s329 = ssub.s32 128, 128
          %330 = vsyncadd [#allocation6], %s329
          %s331 = smul.addr %s37, 128
          %s332 = scalar_lea.hbm %s2, %s331
          %s334 = sshll.u32 [#allocation7], 4
          %s335 = int_to_ptr.vmem [resolvable:$true] %s334
          %337 = dma.hbm_to_vmem [thread:$0]  %s332, 128, %s335, [#allocation6]
        $region20: #{tpu_custom_call.1} parent=11 // pred_fallthru
          _
        // Predicated region
        $region21: #{tpu_custom_call.1} parent=11 // pred_check
          %p338 = pneg %p145
        $region22: #{tpu_custom_call.1} parent=11 // pred_check_branch
          %340 = sbr.rel (%p338) target = $region24
        $region23: #{tpu_custom_call.1} parent=11 // pred_region
          %s342 = ssub.s32 128, 128
          %343 = vsyncadd [#allocation9], %s342
          %s344 = smul.addr %s37, 128
          %s345 = scalar_lea.hbm %s3, %s344
          %s347 = sshll.u32 [#allocation8], 4
          %s348 = int_to_ptr.vmem [resolvable:$true] %s347
          %350 = dma.hbm_to_vmem [thread:$0]  %s345, 128, %s348, [#allocation9]
        $region24: #{tpu_custom_call.1} parent=11 // pred_fallthru
          _
        // Predicated region
        $region25: #{tpu_custom_call.1} parent=11 // pred_check
          %p351 = pneg %p171
        $region26: #{tpu_custom_call.1} parent=11 // pred_check_branch
          %353 = sbr.rel (%p351) target = $region28
        $region27: #{tpu_custom_call.1} parent=11 // pred_region
          %s355 = ssub.s32 128, 128
          %356 = vsyncadd [#allocation9], %s355
          %s357 = smul.addr %s37, 128
          %s358 = scalar_lea.hbm %s4, %s357
          %s360 = sshll.u32 [#allocation10], 4
          %s361 = int_to_ptr.vmem [resolvable:$true] %s360
          %363 = dma.hbm_to_vmem [thread:$0]  %s358, 128, %s361, [#allocation9]
        $region28: #{tpu_custom_call.1} parent=11 // pred_fallthru
          _
        // Predicated region
        $region29: #{tpu_custom_call.1} parent=11 // pred_check
          %p364 = pneg %p192
        $region30: #{tpu_custom_call.1} parent=11 // pred_check_branch
          %366 = sbr.rel (%p364) target = $region32
        $region31: #{tpu_custom_call.1} parent=11 // pred_region
          _
        $region32: #{tpu_custom_call.1} parent=11 // pred_fallthru
          _
        // Predicated region
        $region33: #{tpu_custom_call.1} parent=11 // pred_check
          %p367 = pneg %p213
        $region34: #{tpu_custom_call.1} parent=11 // pred_check_branch
          %369 = sbr.rel (%p367) target = $region36
        $region35: #{tpu_custom_call.1} parent=11 // pred_region
          _
        $region36: #{tpu_custom_call.1} parent=11 // pred_fallthru
          _
      $region12: #{tpu_custom_call.1} parent=5 // pred_fallthru
        _
      %p370 = scmp.lt.s32.totalorder %s27, 2
      // Predicated region
      $region37: #{tpu_custom_call.1} parent=5 // pred_check
        %p371 = pneg %p370
      $region38: #{tpu_custom_call.1} parent=5 // pred_check_branch
        %373 = sbr.rel (%p371) target = $region40
      $region39: #{tpu_custom_call.1} parent=5 // pred_region
        // Predicated region
        $region41: #{tpu_custom_call.1} parent=39 // pred_check
          %p374 = pneg %p61
        $region42: #{tpu_custom_call.1} parent=39 // pred_check_branch
          %376 = sbr.rel (%p374) target = $region44
        $region43: #{tpu_custom_call.1} parent=39 // pred_region
          %s377 = sand.u32 %s51, 1
          %s378 = scalar_lea.sflag [#allocation3], %s377
          %s379 = sand.u32 %s51, 1
          %s380 = smul.addr %s379, 8
          %s381 = scalar_lea.vmem [#allocation2], %s380
          %s383 = ssub.s32 128, 128
          %384 = vsyncadd %s378, %s383
          %s385 = sadd.s32 %s35, %s34
          %s386 = smul.addr %s385, 128
          %s387 = scalar_lea.hbm %s0, %s386
          %s389 = sshll.u32 %s381, 4
          %s390 = int_to_ptr.vmem [resolvable:$true] %s389
          %392 = dma.hbm_to_vmem [thread:$0]  %s387, 128, %s390, %s378
        $region44: #{tpu_custom_call.1} parent=39 // pred_fallthru
          _
      $region40: #{tpu_custom_call.1} parent=5 // pred_fallthru
        _
      %p393 = scmp.le.s32.totalorder 1, %s27
      %p394 = scmp.lt.s32.totalorder %s27, 3
      %p395 = pnand %p393, %p394
      %p396 = pneg %p395
      // Predicated region
      $region45: #{tpu_custom_call.1} parent=5 // pred_check
        _
      $region46: #{tpu_custom_call.1} parent=5 // pred_check_branch
        %398 = sbr.rel (%p395) target = $region48
      $region47: #{tpu_custom_call.1} parent=5 // pred_region
        %s399 = ssub.s32 %s27, 1
        %s400 = sand.u32 %s54, 1
        %s401 = scalar_lea.sflag [#allocation3], %s400
        %s402 = sand.u32 %s54, 1
        %s403 = smul.addr %s402, 8
        %s404 = scalar_lea.vmem [#allocation2], %s403
        // Predicated region
        $region49: #{tpu_custom_call.1} parent=47 // pred_check
          %p405 = pneg %p67
        $region50: #{tpu_custom_call.1} parent=47 // pred_check_branch
          %407 = sbr.rel (%p405) target = $region52
        $region51: #{tpu_custom_call.1} parent=47 // pred_region
          %408 = dma.done %s401, 128
        $region52: #{tpu_custom_call.1} parent=47 // pred_fallthru
          _
        // Predicated region
        $region53: #{tpu_custom_call.1} parent=47 // pred_check
          %p409 = pneg %p93
        $region54: #{tpu_custom_call.1} parent=47 // pred_check_branch
          %411 = sbr.rel (%p409) target = $region56
        $region55: #{tpu_custom_call.1} parent=47 // pred_region
          %412 = dma.done [#allocation6], 128
        $region56: #{tpu_custom_call.1} parent=47 // pred_fallthru
          _
        // Predicated region
        $region57: #{tpu_custom_call.1} parent=47 // pred_check
          %p413 = pneg %p119
        $region58: #{tpu_custom_call.1} parent=47 // pred_check_branch
          %415 = sbr.rel (%p413) target = $region60
        $region59: #{tpu_custom_call.1} parent=47 // pred_region
          %416 = dma.done [#allocation6], 128
        $region60: #{tpu_custom_call.1} parent=47 // pred_fallthru
          _
        // Predicated region
        $region61: #{tpu_custom_call.1} parent=47 // pred_check
          %p417 = pneg %p145
        $region62: #{tpu_custom_call.1} parent=47 // pred_check_branch
          %419 = sbr.rel (%p417) target = $region64
        $region63: #{tpu_custom_call.1} parent=47 // pred_region
          %420 = dma.done [#allocation9], 128
        $region64: #{tpu_custom_call.1} parent=47 // pred_fallthru
          _
        // Predicated region
        $region65: #{tpu_custom_call.1} parent=47 // pred_check
          %p421 = pneg %p171
        $region66: #{tpu_custom_call.1} parent=47 // pred_check_branch
          %423 = sbr.rel (%p421) target = $region68
        $region67: #{tpu_custom_call.1} parent=47 // pred_region
          %424 = dma.done [#allocation9], 128
        $region68: #{tpu_custom_call.1} parent=47 // pred_fallthru
          _
        %s425 = sand.u32 %s54, 1
        %s426 = scalar_lea.sflag [#allocation3], %s425
        %s427 = sand.u32 %s54, 1
        %s428 = smul.addr %s427, 8
        %s429 = scalar_lea.vmem [#allocation2], %s428
        %p430 = pneg %p67
        %p431 = pneg %p64
        %p432 = pneg %p93
        %p433 = pneg %p90
        %p434 = pneg %p119
        %p435 = pneg %p116
        %p436 = pneg %p145
        %p437 = pneg %p142
        %p438 = pneg %p171
        %p439 = pneg %p168
        %p440 = pneg %p192
        %p441 = pneg %p189
        %p442 = pneg %p213
        %p443 = pneg %p210
        %p444 = pneg %p241
        %p445 = pneg %p238
        %s446 = sand.u32 %s228, 1
        %s447 = scalar_lea.sflag [#allocation4], %s446
        %s448 = sand.u32 %s228, 1
        %s449 = smul.addr %s448, 4
        %s450 = scalar_lea.vmem [#allocation11], %s449
        %p451 = pneg %p269
        %p452 = pneg %p266
        %s453 = sand.u32 %s32, 1
        %s454 = scalar_lea.sflag [#allocation13], %s453
        %s455 = sand.u32 %s256, 1
        %s456 = smul.addr %s455, 4
        %s457 = scalar_lea.vmem [#allocation12], %s456
        %p458 = pneg %p297
        %p459 = pneg %p294
        %s460 = sand.u32 %s32, 1
        %s461 = scalar_lea.sflag [#allocation13], %s460
        %s462 = sand.u32 %s284, 1
        %s463 = smul.addr %s462, 4
        %s464 = scalar_lea.vmem [#allocation14], %s463
        %v466 = vld [vmem:[%s404] sm:$0xff]
        %v467 = vmul.f32 %v466, %v466
        %vm468 = vcmask 261120
        %v469 = vsel %vm468, %v467, 0.0
        %470 = vadd.xlane.f32.xlu0 %v469
        %v471 = vpop.xlane.xlu0 %470
        %v472 = vrcp.pop 32.0
        %v473 = vmul.f32 %v471, %v472
        %v474 = vadd.f32 %v473, 1e-05
        %v475 = vrsqrt.pop %v474
        %v476 = vmul.f32 %v466, %v475
        %v477 = vld [vmem:[%s5] sm:$0x1]
        %v479 = vlaneseq
        %v480 = vshrl.u32 %v479, 7
        %v481 = vsub.s32 0, %v480
        %v482 = vrot.slane %v477, %v481
        %v484 = vmul.f32 %v476, %v482
        %v485 = vpack.c.bf16 %v484, %v484
        %v486 = vld [vmem:[%s6] sm:$0xf]
        %v487 = vld [vmem:[%s6 + $0x4] sm:$0xf]
        %v488 = vld [vmem:[%s6 + $0x8] sm:$0xf]
        %v489 = vld [vmem:[%s6 + $0xc] sm:$0xf]
        %v494 = vunpack.c.l.b16 %v486
        %v495 = vunpack.c.l.b16 %v487
        %v496 = vunpack.c.l.b16 %v488
        %v497 = vunpack.c.l.b16 %v489
        %v498 = vpack.c.b16 %v495, %v494
        %v499 = vpack.c.b16 %v497, %v496
        %v503 = vsel %vm468, %v485, 0
        %505 = vmatprep.subr.bf16.mxu0 0
        %506 = vmatpush1.bf16.msra.mxu0 %v498
        %507 = vmatprep.subr.bf16.mxu0 0
        %508 = vmatpush1.bf16.msra.mxu0 %v499
        %509 = vmatprep.subr.bf16.mxu0 0
        %510 = vmatpush1.bf16.msra.mxu0 0
        %511 = vmatprep.subr.bf16.mxu0 0
        %512 = vmatpush1.bf16.msra.mxu0 0
        %513 = vmatprep.subr.bf16.mxu0 0
        %514 = vmatpush1.bf16.msra.mxu0 0
        %515 = vmatprep.subr.bf16.mxu0 0
        %516 = vmatpush1.bf16.msra.mxu0 0
        %517 = vmatprep.subr.bf16.mxu0 0
        %518 = vmatpush1.bf16.msra.mxu0 0
        %519 = vmatprep.subr.bf16.mxu0 0
        %520 = vmatpush1.bf16.msra.mxu0 0
        %521 = vmatprep.subr.bf16.mxu0 0
        %522 = vmatpush1.bf16.msra.mxu0 0
        %523 = vmatprep.subr.bf16.mxu0 0
        %524 = vmatpush1.bf16.msra.mxu0 0
        %525 = vmatprep.subr.bf16.mxu0 0
        %526 = vmatpush1.bf16.msra.mxu0 0
        %527 = vmatprep.subr.bf16.mxu0 0
        %528 = vmatpush1.bf16.msra.mxu0 0
        %529 = vmatprep.subr.bf16.mxu0 0
        %530 = vmatpush1.bf16.msra.mxu0 0
        %531 = vmatprep.subr.bf16.mxu0 0
        %532 = vmatpush1.bf16.msra.mxu0 0
        %533 = vmatprep.subr.bf16.mxu0 0
        %534 = vmatpush1.bf16.msra.mxu0 0
        %535 = vmatprep.subr.bf16.mxu0 0
        %536 = vmatpush1.bf16.msra.mxu0 0
        %537 = vmatprep.mubr.bf16.mxu0 0
        %538 = vmatmul.mubr.bf16.gmra.mrb[0].mxu0 %v503
        %v539 = vpop.f32.mrb[0].mxu0
        %v540 = vadd.f32 0.0, %v539
        %v541 = vpop.f32.mrb[0].mxu0
        %v542 = vpop.f32.mrb[0].mxu0
        %v543 = vpop.f32.mrb[0].mxu0
        %544 = vdwg.mxu0
        %v545 = vld [vmem:[#allocation5] sm:$0xff]
        %v546 = vld [vmem:[#allocation7] sm:$0xff]
        %548 = vrot.lane.b32.xlu0 %v540, 124
        %v549 = vpop.permute.xlu0 %548
        %551 = vrot.lane.b32.xlu0 %v540, 4
        %v552 = vpop.permute.xlu0 %551
        %vm554 = vcmask 31744
        %v555 = vsel %vm554, %v549, %v552
        %v556 = vmul.f32 %v540, %v545
        %v557 = vmul.f32 %v555, %v546
        %v558 = vadd.f32 %v556, %v557
        %559 = vrot.lane.b32.xlu0 %v540, 116
        %v560 = vpop.permute.xlu0 %559
        %v562 = vsel %vm554, %v560, %v549
        %564 = vrot.lane.b32.xlu0 %v545, 8
        %v565 = vpop.permute.xlu0 %564
        %v567 = vmul.f32 %v540, %v565
        %v568 = vmul.f32 %v562, %v546
        %570 = vrot.lane.b32.xlu0 %v568, 8
        %v571 = vpop.permute.xlu0 %570
        %v573 = vadd.f32 %v567, %v571
        %574 = vrot.lane.b32.xlu0 %v540, 108
        %v575 = vpop.permute.xlu0 %574
        %v577 = vsel %vm554, %v575, %v560
        %578 = vrot.lane.b32.xlu0 %v545, 16
        %v579 = vpop.permute.xlu0 %578
        %v581 = vmul.f32 %v540, %v579
        %v582 = vmul.f32 %v577, %v546
        %584 = vrot.lane.b32.xlu0 %v582, 16
        %v585 = vpop.permute.xlu0 %584
        %v587 = vadd.f32 %v581, %v585
        %588 = vrot.lane.b32.xlu0 %v540, 100
        %v589 = vpop.permute.xlu0 %588
        %v591 = vsel %vm554, %v589, %v575
        %592 = vrot.lane.b32.xlu0 %v545, 24
        %v593 = vpop.permute.xlu0 %592
        %v595 = vmul.f32 %v540, %v593
        %v596 = vmul.f32 %v591, %v546
        %598 = vrot.lane.b32.xlu0 %v596, 24
        %v599 = vpop.permute.xlu0 %598
        %v601 = vadd.f32 %v595, %v599
        %vm602 = vcmask 64512
        %v603 = vsel %vm602, %v558, %v573
        %vm604 = vcmask 130048
        %v605 = vsel %vm604, %v603, %v587
        %vm606 = vcmask 195584
        %v607 = vsel %vm606, %v605, %v601
        %v608 = vpack.c.bf16 %v607, %v607
        %vm609 = vcmask 257024
        %610 = vst.msk [vmem:[%s450] sm:$0xf] %vm609, %v608
        %v611 = vld [vmem:[#allocation8] sm:$0xff]
        %v612 = vld [vmem:[#allocation10] sm:$0xff]
        %613 = vrot.lane.b32.xlu0 %v540, 92
        %v614 = vpop.permute.xlu0 %613
        %v616 = vsel %vm554, %v614, %v589
        %618 = vrot.lane.b32.xlu0 %v611, 32
        %v619 = vpop.permute.xlu0 %618
        %v621 = vmul.f32 %v540, %v619
        %v622 = vmul.f32 %v616, %v612
        %624 = vrot.lane.b32.xlu0 %v622, 32
        %v625 = vpop.permute.xlu0 %624
        %v627 = vadd.f32 %v621, %v625
        %628 = vrot.lane.b32.xlu0 %v540, 84
        %v629 = vpop.permute.xlu0 %628
        %v631 = vsel %vm554, %v629, %v614
        %632 = vrot.lane.b32.xlu0 %v611, 40
        %v633 = vpop.permute.xlu0 %632
        %v635 = vmul.f32 %v540, %v633
        %v636 = vmul.f32 %v631, %v612
        %638 = vrot.lane.b32.xlu0 %v636, 40
        %v639 = vpop.permute.xlu0 %638
        %v641 = vadd.f32 %v635, %v639
        %643 = vrot.lane.b32.xlu0 %v627, 96
        %v644 = vpop.permute.xlu0 %643
        %647 = vrot.lane.b32.xlu0 %v641, 96
        %v648 = vpop.permute.xlu0 %647
        %v650 = vsel %vm602, %v644, %v648
        %v651 = vpack.c.bf16 %v650, %v650
        %vm652 = vcmask 125952
        %653 = vst.msk [vmem:[%s457] sm:$0xf] %vm652, %v651
        %v654 = vpack.c.bf16 %v540, %v540
        %v656 = vunpack.c.l.b16 %v654
        %v657 = vpack.c.b16 %v656, %v656
        %658 = vrot.lane.b32.xlu0 %v657, 80
        %v659 = vpop.permute.xlu0 %658
        %661 = vst.msk [vmem:[%s464] sm:$0xf] %vm652, %v659
        %s662 = sand.u32 %s228, 1
        %s663 = scalar_lea.sflag [#allocation4], %s662
        %s664 = sand.u32 %s228, 1
        %s665 = smul.addr %s664, 4
        %s666 = scalar_lea.vmem [#allocation11], %s665
        %s667 = sand.u32 %s32, 1
        %s668 = scalar_lea.sflag [#allocation13], %s667
        %s669 = sand.u32 %s256, 1
        %s670 = smul.addr %s669, 4
        %s671 = scalar_lea.vmem [#allocation12], %s670
        %s672 = sand.u32 %s32, 1
        %s673 = scalar_lea.sflag [#allocation13], %s672
        %s674 = sand.u32 %s284, 1
        %s675 = smul.addr %s674, 4
        %s676 = scalar_lea.vmem [#allocation14], %s675
        // Predicated region
        $region69: #{tpu_custom_call.1} parent=47 // pred_check
          %p677 = pneg %p238
        $region70: #{tpu_custom_call.1} parent=47 // pred_check_branch
          %679 = sbr.rel (%p677) target = $region72
        $region71: #{tpu_custom_call.1} parent=47 // pred_region
          %s681 = ssub.s32 64, 64
          %682 = vsyncadd %s663, %s681
          %s683 = sadd.s32 %s37, %s36
          %s684 = smul.addr %s683, 64
          %s685 = scalar_lea.hbm %s7, %s684
          %s687 = sshll.u32 %s666, 4
          %s688 = int_to_ptr.vmem [resolvable:$true] %s687
          %690 = dma.vmem_to_hbm [thread:$0]  %s688, 64, %s685, %s663
        $region72: #{tpu_custom_call.1} parent=47 // pred_fallthru
          _
        // Predicated region
        $region73: #{tpu_custom_call.1} parent=47 // pred_check
          %p691 = pneg %p266
        $region74: #{tpu_custom_call.1} parent=47 // pred_check_branch
          %693 = sbr.rel (%p691) target = $region76
        $region75: #{tpu_custom_call.1} parent=47 // pred_region
          %s695 = ssub.s32 64, 64
          %696 = vsyncadd %s668, %s695
          %s697 = sadd.s32 %s37, %s36
          %s698 = smul.addr %s697, 64
          %s699 = scalar_lea.hbm %s8, %s698
          %s701 = sshll.u32 %s671, 4
          %s702 = int_to_ptr.vmem [resolvable:$true] %s701
          %704 = dma.vmem_to_hbm [thread:$0]  %s702, 64, %s699, %s668
        $region76: #{tpu_custom_call.1} parent=47 // pred_fallthru
          _
        // Predicated region
        $region77: #{tpu_custom_call.1} parent=47 // pred_check
          %p705 = pneg %p294
        $region78: #{tpu_custom_call.1} parent=47 // pred_check_branch
          %707 = sbr.rel (%p705) target = $region80
        $region79: #{tpu_custom_call.1} parent=47 // pred_region
          %s709 = ssub.s32 64, 64
          %710 = vsyncadd %s673, %s709
          %s711 = sadd.s32 %s37, %s36
          %s712 = smul.addr %s711, 64
          %s713 = scalar_lea.hbm %s9, %s712
          %s715 = sshll.u32 %s676, 4
          %s716 = int_to_ptr.vmem [resolvable:$true] %s715
          %718 = dma.vmem_to_hbm [thread:$0]  %s716, 64, %s713, %s673
        $region80: #{tpu_custom_call.1} parent=47 // pred_fallthru
          _
      $region48: #{tpu_custom_call.1} parent=5 // pred_fallthru
        _
      %p719 = scmp.le.s32.totalorder 2, %s27
      // Predicated region
      $region81: #{tpu_custom_call.1} parent=5 // pred_check
        %p720 = pneg %p719
      $region82: #{tpu_custom_call.1} parent=5 // pred_check_branch
        %722 = sbr.rel (%p720) target = $region84
      $region83: #{tpu_custom_call.1} parent=5 // pred_region
        %s723 = ssub.s32 %s27, 2
        // Predicated region
        $region85: #{tpu_custom_call.1} parent=83 // pred_check
          %p724 = pneg %p244
        $region86: #{tpu_custom_call.1} parent=83 // pred_check_branch
          %726 = sbr.rel (%p724) target = $region88
        $region87: #{tpu_custom_call.1} parent=83 // pred_region
          %s727 = sand.u32 %s229, 1
          %s728 = scalar_lea.sflag [#allocation4], %s727
          %s729 = sand.u32 %s229, 1
          %s730 = smul.addr %s729, 4
          %s731 = scalar_lea.vmem [#allocation11], %s730
          %732 = dma.done %s728, 64
        $region88: #{tpu_custom_call.1} parent=83 // pred_fallthru
          _
        // Predicated region
        $region89: #{tpu_custom_call.1} parent=83 // pred_check
          %p733 = pneg %p272
        $region90: #{tpu_custom_call.1} parent=83 // pred_check_branch
          %735 = sbr.rel (%p733) target = $region92
        $region91: #{tpu_custom_call.1} parent=83 // pred_region
          %s736 = sand.u32 %s33, 1
          %s737 = scalar_lea.sflag [#allocation13], %s736
          %s738 = sand.u32 %s257, 1
          %s739 = smul.addr %s738, 4
          %s740 = scalar_lea.vmem [#allocation12], %s739
          %741 = dma.done %s737, 64
        $region92: #{tpu_custom_call.1} parent=83 // pred_fallthru
          _
        // Predicated region
        $region93: #{tpu_custom_call.1} parent=83 // pred_check
          %p742 = pneg %p300
        $region94: #{tpu_custom_call.1} parent=83 // pred_check_branch
          %744 = sbr.rel (%p742) target = $region96
        $region95: #{tpu_custom_call.1} parent=83 // pred_region
          %s745 = sand.u32 %s33, 1
          %s746 = scalar_lea.sflag [#allocation13], %s745
          %s747 = sand.u32 %s285, 1
          %s748 = smul.addr %s747, 4
          %s749 = scalar_lea.vmem [#allocation14], %s748
          %750 = dma.done %s746, 64
        $region96: #{tpu_custom_call.1} parent=83 // pred_fallthru
          _
      $region84: #{tpu_custom_call.1} parent=5 // pred_fallthru
        _
    $region6: #{tpu_custom_call.1} parent=1 // loop_footer
      %s31 = sadd.s32 1, %s27
    $region7: #{tpu_custom_call.1} parent=1 // loop_footer_branch
      %26 = sbr.rel target = $region3
    $region8: #{tpu_custom_call.1} parent=1 // loop_exit
      _
    %751 = vsyncpa [#allocation3], 1
    %s752 = scalar_lea.sflag [#allocation3], 1
    %753 = vsyncpa %s752, 1
    %754 = vsyncpa [#allocation6], 1
    %755 = vsyncpa [#allocation9], 1
    %756 = vsyncpa [#allocation4], 1
    %s757 = scalar_lea.sflag [#allocation4], 1
    %758 = vsyncpa %s757, 1
    %759 = vsyncpa [#allocation13], 1
    %s760 = scalar_lea.sflag [#allocation13], 1
    %761 = vsyncpa %s760, 1

</llo_original>
